<compile_context>
chip_gen: v7x
topology: tpu7x:2x2x1
jax: 0.10.0
libtpu: 0.0.40
codegen_flags: <defaults>
</compile_context>

<pallas_src>
import functools
import math

import jax
import jax.numpy as jnp
from jax.experimental import pallas as pl
from jax.experimental.pallas import tpu as pltpu


# ----------------------------------------------------------------------------
# Pallas kernel
# ----------------------------------------------------------------------------
def _biaffine_kernel(x_ref, y_ref, w_ref, rb_ref, o_ref, aff_ref, last_ref,
                     *, ti, tj, d, x_resident, y_resident):
    """Grid: (batch b, label o, x-tile i, y-tile j); j innermost + sequential.

    aff_ref  : VMEM (D, ti) scratch in the input dtype, rebuilt once per (b,o,i)
    last_ref : VMEM (1, ti) f32 scratch, y-bias contribution per x row
    """
    i = pl.program_id(2)
    j = pl.program_id(3)

    # Rebuild the per-(b, o, i) intermediate once; reuse it for every j tile.
    @pl.when(j == 0)
    def _():
        if x_resident:
            ii = pl.multiple_of(i * ti, ti)
            x_blk = x_ref[0, pl.ds(ii, ti), :]               # (ti, D)
        else:
            x_blk = x_ref[0]                                 # (ti, D)
        # affx[r, il] = sum_d wext[r, d] * x[il, d] + rbext[r]
        #   rows r <  D : transposed affine intermediate (aff^T)
        #   row  r == D : y-bias contribution (zeros when bias_y=False)
        affx = jax.lax.dot_general(
            w_ref[0], x_blk, (((1,), (1,)), ((), ())),
            preferred_element_type=jnp.float32)              # (D+1, ti) f32
        affx = affx + rb_ref[0]                              # (D+1, 1) broadcast
        aff_ref[...] = affx[:d].astype(aff_ref.dtype)        # one cast, amortized
        last_ref[...] = affx[d:]                             # (1, ti) f32

    if y_resident:
        jj = pl.multiple_of(j * tj, tj)
        y_blk = y_ref[0, pl.ds(jj, tj), :]                   # (tj, D)
    else:
        y_blk = y_ref[0]                                     # (tj, D)

    # Hot matmul: plain (M,K) x (K,N), operands in native dtype, f32 accumulate.
    res = jax.lax.dot_general(
        y_blk, aff_ref[...], (((1,), (0,)), ((), ())),
        preferred_element_type=jnp.float32)                  # (tj, ti)
    res = res + last_ref[...]                                # broadcast (1, ti)
    o_ref[0, 0] = res.astype(o_ref.dtype)


# ----------------------------------------------------------------------------
# Tiling / VMEM helpers
# ----------------------------------------------------------------------------
def _pick_tile(n, cap, aligns):
    """Largest t <= cap with n % t == 0 and t aligned to one of `aligns`."""
    if n <= cap:
        return n
    for a in aligns:
        t = (cap // a) * a
        while t >= a:
            if n % t == 0:
                return t
            t -= a
    return None


def _vmem_tile_bytes(rows, cols, itemsize):
    """Rough VMEM footprint of a (rows, cols) tile after (8, 128) padding."""
    return (-(-rows // 8) * 8) * (-(-cols // 128) * 128) * itemsize


_RESIDENT_BUDGET = 36 << 20          # leave headroom on v7x (64 MiB VMEM / TC)


# ----------------------------------------------------------------------------
# Wrapper
# ----------------------------------------------------------------------------
def biaffine_forward(x, y, weight, bias, *, output_dim,
                     bias_x=True, bias_y=True, out_dtype=None):
    """Pallas forward of `_Biaffine`.

    x, y   : (B, S, D)
    weight : (O * Dy, Dx)  -- torch nn.Linear.weight layout
    bias   : (O * Dy,)
    returns: (B, S, S, O), squeezed to (B, S, S) when O == 1
    """
    assert x.shape == y.shape and x.ndim == 3
    B, S, D = x.shape
    O = output_dim
    Dx = D + int(bias_x)
    Dy = D + int(bias_y)
    assert weight.shape == (O * Dy, Dx), (weight.shape, (O * Dy, Dx))
    assert bias.shape == (O * Dy,)

    cdtype = x.dtype                                # matmul / scratch dtype
    odtype = jnp.dtype(out_dtype) if out_dtype is not None else x.dtype
    in_item = jnp.dtype(x.dtype).itemsize
    cd_item = jnp.dtype(cdtype).itemsize
    out_item = jnp.dtype(odtype).itemsize

    # ---- weight layout plumbing: fold bias_x / bias_y, no ones-concat ------
    #   wext[o, d', d] = weight[o*Dy + d', d]        for d' < Dy, d < D
    #   rbext[o, d']   = bias[o*Dy + d'] (+ x-bias column if bias_x)
    # Row d' == D of wext/rbext carries the y-bias contribution; it is padded
    # with zeros when bias_y=False so the kernel is branch-free.
    W3 = weight.reshape(O, Dy, Dx)
    wext = W3[:, :, :D]                                          # (O, Dy, D)
    rbext = bias.reshape(O, Dy).astype(jnp.float32)              # (O, Dy)
    if bias_x:
        rbext = rbext + W3[:, :, D].astype(jnp.float32)
    if not bias_y:
        wext = jnp.concatenate([wext, jnp.zeros((O, 1, D), wext.dtype)], axis=1)
        rbext = jnp.concatenate([rbext, jnp.zeros((O, 1), rbext.dtype)], axis=1)
    wext = wext.astype(cdtype)                                   # (O, D+1, D)
    rbext = rbext[:, :, None]                                    # (O, D+1, 1) f32

    # ---- pad S so output blocks stay lane/sublane-dense --------------------
    Sp = -(-S // 8) * 8
    if Sp > 512 and _pick_tile(Sp, 512, (128,)) is None:
        Sp = -(-S // 128) * 128
    if Sp != S:
        pad = ((0, 0), (0, Sp - S), (0, 0))
        x = jnp.pad(x, pad)
        y = jnp.pad(y, pad)

    ti = _pick_tile(Sp, 512, (128,))            # output lane dim: 128-aligned
    tj = _pick_tile(Sp, 512, (256, 128, 8))     # output sublane / MXU M dim

    # ---- residency decision + VMEM budget (v7x has only 64 MiB / TC) -------
    def footprint(x_res, y_res):
        fp = 2 * _vmem_tile_bytes(Sp if x_res else ti, D, in_item)       # x
        fp += 2 * _vmem_tile_bytes(Sp if y_res else tj, D, in_item)      # y
        fp += 2 * _vmem_tile_bytes(D + 1, D, cd_item)                    # wext
        fp += 2 * _vmem_tile_bytes(D + 1, 1, 4)                          # rbext
        fp += 2 * _vmem_tile_bytes(tj, ti, out_item)                     # out blk
        fp += _vmem_tile_bytes(D, ti, cd_item) + _vmem_tile_bytes(1, ti, 4)
        return fp

    if footprint(True, True) <= _RESIDENT_BUDGET:
        x_res = y_res = True
    elif footprint(False, True) <= _RESIDENT_BUDGET:
        x_res, y_res = False, True
    else:
        x_res = y_res = False
    fp = footprint(x_res, y_res)
    vmem_limit = int(min(max(fp + (16 << 20), 32 << 20), 56 << 20))

    if x_res:
        x_spec = pl.BlockSpec((1, Sp, D), lambda b, o, i, j: (b, 0, 0))
    else:
        x_spec = pl.BlockSpec((1, ti, D), lambda b, o, i, j: (b, i, 0))
    if y_res:
        y_spec = pl.BlockSpec((1, Sp, D), lambda b, o, i, j: (b, 0, 0))
    else:
        y_spec = pl.BlockSpec((1, tj, D), lambda b, o, i, j: (b, j, 0))

    kernel = functools.partial(_biaffine_kernel, ti=ti, tj=tj, d=D,
                               x_resident=x_res, y_resident=y_res)

    out = pl.pallas_call(
        kernel,
        out_shape=jax.ShapeDtypeStruct((B, O, Sp, Sp), odtype),
        grid_spec=pltpu.PrefetchScalarGridSpec(
            num_scalar_prefetch=0,
            grid=(B, O, Sp // ti, Sp // tj),
            in_specs=[
                x_spec,
                y_spec,
                pl.BlockSpec((1, D + 1, D), lambda b, o, i, j: (o, 0, 0)),
                pl.BlockSpec((1, D + 1, 1), lambda b, o, i, j: (o, 0, 0)),
            ],
            out_specs=pl.BlockSpec((1, 1, tj, ti),
                                   lambda b, o, i, j: (b, o, j, i)),
            scratch_shapes=[pltpu.VMEM((D, ti), cdtype),
                            pltpu.VMEM((1, ti), jnp.float32)],
        ),
        compiler_params=pltpu.CompilerParams(
            dimension_semantics=("parallel", "parallel", "parallel",
                                 "arbitrary"),
            vmem_limit_bytes=vmem_limit,
        ),
    )(x, y, wext, rbext)

    if Sp != S:
        out = out[:, :, :S, :S]
    if O == 1:
        return out[:, 0]                          # free squeeze (torch layout)
    # TODO(synk): the torch return layout (B,S,S,O) forces this permute for
    # O > 1; consumers that accept the O-major (B,O,S,S) slab can skip it.
    return jnp.transpose(out, (0, 2, 3, 1))


# ----------------------------------------------------------------------------
# Pure-JAX reference (line-by-line mirror of the torch forward)
# ----------------------------------------------------------------------------
def _ref_biaffine(x, y, weight, bias, output_dim, bias_x=True, bias_y=True):
    bz, seq_len, _ = x.shape
    if bias_x:
        x = jnp.concatenate([x, jnp.ones_like(x[..., :1])], axis=-1)
    if bias_y:
        y = jnp.concatenate([y, jnp.ones_like(y[..., :1])], axis=-1)
    affine = x @ weight.T + bias
    affine = affine.reshape(bz, seq_len * output_dim, -1)
    biaffine = jnp.matmul(affine, jnp.transpose(y, (0, 2, 1)))
    biaffine = jnp.transpose(biaffine, (0, 2, 1))
    biaffine = biaffine.reshape(bz, seq_len, seq_len, -1)
    if biaffine.shape[-1] == 1:
        biaffine = jnp.squeeze(biaffine, axis=-1)
    return biaffine


# ----------------------------------------------------------------------------
# Demo / correctness smoke test
# ----------------------------------------------------------------------------
if __name__ == "__main__":
    def run_case(B, S, D, O, bias_x, bias_y, key):
        kx, ky, kw, kb = jax.random.split(key, 4)
        x = jax.random.normal(kx, (B, S, D), jnp.float32)
        y = jax.random.normal(ky, (B, S, D), jnp.float32)
        Dx = D + int(bias_x)
        Dy = D + int(bias_y)
        bound = 1.0 / math.sqrt(Dx)                 # nn.Linear default init
        weight = jax.random.uniform(kw, (O * Dy, Dx), jnp.float32,
                                    -bound, bound)
        bias = jax.random.uniform(kb, (O * Dy,), jnp.float32, -bound, bound)

        out = biaffine_forward(x, y, weight, bias, output_dim=O,
                               bias_x=bias_x, bias_y=bias_y)
        out = jax.block_until_ready(out)

        ref = _ref_biaffine(x, y, weight, bias, O, bias_x, bias_y)
        assert out.shape == ref.shape, (out.shape, ref.shape)
        assert jnp.allclose(out, ref, atol=2e-3, rtol=2e-3), \
            float(jnp.max(jnp.abs(out - ref)))

    key = jax.random.PRNGKey(0)
    k1, k2, k3 = jax.random.split(key, 3)
    run_case(2, 128, 64, 4, True, True, k1)    # multi-label, aligned S
    run_case(1, 64, 32, 1, True, False, k2)    # O==1 squeeze path, no y-bias
    run_case(2, 100, 32, 3, False, True, k3)   # padded S, no x-bias

    print("KERNEL_OK")
</pallas_src>

<mosaic_0001>
module attributes {stable_mosaic.version = 11 : i64} {
  func.func @_biaffine_kernel(%arg0: i32, %arg1: i32, %arg2: i32, %arg3: i32, %arg4: memref<1x128x64xf32, #tpu.memory_space<vmem>>, %arg5: memref<1x128x64xf32, #tpu.memory_space<vmem>>, %arg6: memref<1x65x64xf32, #tpu.memory_space<vmem>>, %arg7: memref<1x65x1xf32, #tpu.memory_space<vmem>>, %arg8: memref<1x1x128x128xf32, #tpu.memory_space<vmem>>, %arg9: memref<64x128xf32, #tpu.memory_space<vmem>>, %arg10: memref<1x128xf32, #tpu.memory_space<vmem>>) attributes {dimension_semantics = [#tpu.dimension_semantics<parallel>, #tpu.dimension_semantics<parallel>, #tpu.dimension_semantics<parallel>, #tpu.dimension_semantics<arbitrary>], iteration_bounds = array<i64: 2, 4, 1, 1>, scalar_prefetch = 0 : i64, scratch_operands = 2 : i64, tpu.core_type = #tpu.core_type<tc>, window_params = [{transform_indices = @transform_0, window_bounds = array<i64: 1, 128, 64>}, {transform_indices = @transform_1, window_bounds = array<i64: 1, 128, 64>}, {transform_indices = @transform_2, window_bounds = array<i64: 1, 65, 64>}, {transform_indices = @transform_3, window_bounds = array<i64: 1, 65, 1>}, {transform_indices = @transform_4, window_bounds = array<i64: 1, 1, 128, 128>}]} {
    %c0_i32 = arith.constant 0 : i32
    %0 = arith.cmpi eq, %arg3, %c0_i32 : i32
    %1 = arith.extui %0 : i1 to i32
    %c0_i32_0 = arith.constant 0 : i32
    %2 = arith.cmpi ne, %1, %c0_i32_0 : i32
    scf.if %2 {
      %c128_i32_10 = arith.constant 128 : i32
      %16 = arith.muli %arg2, %c128_i32_10 : i32
      %17 = tpu.assume_multiple %16, 128 : i32
      %c0_11 = arith.constant 0 : index
      %18 = arith.index_cast %17 : i32 to index
      %c0_12 = arith.constant 0 : index
      %19 = vector.load %arg4[%c0_11, %18, %c0_12] : memref<1x128x64xf32, #tpu.memory_space<vmem>>, vector<1x128x64xf32>
      %20 = vector.shape_cast %19 : vector<1x128x64xf32> to vector<128x64xf32>
      %c0_13 = arith.constant 0 : index
      %c0_14 = arith.constant 0 : index
      %c0_15 = arith.constant 0 : index
      %21 = vector.load %arg6[%c0_13, %c0_14, %c0_15] : memref<1x65x64xf32, #tpu.memory_space<vmem>>, vector<1x65x64xf32>
      %22 = vector.shape_cast %21 : vector<1x65x64xf32> to vector<65x64xf32>
      %cst_16 = arith.constant dense<0.000000e+00> : vector<65x128xf32>
      %23 = tpu.matmul %22, %20, %cst_16 {dimension_numbers = #tpu.dot_dimension_numbers<[1], [1], [0], [0], [0, 0, 1, 0], [], []>} : vector<65x64xf32>, vector<128x64xf32>, vector<65x128xf32> -> vector<65x128xf32>
      %c0_17 = arith.constant 0 : index
      %c0_18 = arith.constant 0 : index
      %c0_19 = arith.constant 0 : index
      %24 = vector.load %arg7[%c0_17, %c0_18, %c0_19] : memref<1x65x1xf32, #tpu.memory_space<vmem>>, vector<1x65x1xf32>
      %25 = vector.shape_cast %24 : vector<1x65x1xf32> to vector<65x1xf32>
      %26 = vector.broadcast %25 : vector<65x1xf32> to vector<65x128xf32>
      %27 = arith.addf %23, %26 : vector<65x128xf32>
      %28 = vector.extract_strided_slice %27 {offsets = [0, 0], sizes = [64, 128], strides = [1, 1]} : vector<65x128xf32> to vector<64x128xf32>
      %c0_20 = arith.constant 0 : index
      %c0_21 = arith.constant 0 : index
      %29 = vector.load %arg9[%c0_20, %c0_21] : memref<64x128xf32, #tpu.memory_space<vmem>>, vector<64x128xf32>
      tpu.vector_store %arg9[%c0_20, %c0_21], %28 {strides = array<i32>} : memref<64x128xf32, #tpu.memory_space<vmem>>, vector<64x128xf32>,
      %30 = vector.extract_strided_slice %27 {offsets = [64, 0], sizes = [1, 128], strides = [1, 1]} : vector<65x128xf32> to vector<1x128xf32>
      %c0_22 = arith.constant 0 : index
      %c0_23 = arith.constant 0 : index
      %31 = vector.load %arg10[%c0_22, %c0_23] : memref<1x128xf32, #tpu.memory_space<vmem>>, vector<1x128xf32>
      tpu.vector_store %arg10[%c0_22, %c0_23], %30 {strides = array<i32>} : memref<1x128xf32, #tpu.memory_space<vmem>>, vector<1x128xf32>,
    } else {
    }
    %c128_i32 = arith.constant 128 : i32
    %3 = arith.muli %arg3, %c128_i32 : i32
    %4 = tpu.assume_multiple %3, 128 : i32
    %c0 = arith.constant 0 : index
    %5 = arith.index_cast %4 : i32 to index
    %c0_1 = arith.constant 0 : index
    %6 = vector.load %arg5[%c0, %5, %c0_1] : memref<1x128x64xf32, #tpu.memory_space<vmem>>, vector<1x128x64xf32>
    %7 = vector.shape_cast %6 : vector<1x128x64xf32> to vector<128x64xf32>
    %c0_2 = arith.constant 0 : index
    %c0_3 = arith.constant 0 : index
    %8 = vector.load %arg9[%c0_2, %c0_3] : memref<64x128xf32, #tpu.memory_space<vmem>>, vector<64x128xf32>
    %cst = arith.constant dense<0.000000e+00> : vector<128x128xf32>
    %9 = tpu.matmul %7, %8, %cst {dimension_numbers = #tpu.dot_dimension_numbers<[1], [0], [0], [1], [0, 0, 1, 1], [], []>} : vector<128x64xf32>, vector<64x128xf32>, vector<128x128xf32> -> vector<128x128xf32>
    %c0_4 = arith.constant 0 : index
    %c0_5 = arith.constant 0 : index
    %10 = vector.load %arg10[%c0_4, %c0_5] : memref<1x128xf32, #tpu.memory_space<vmem>>, vector<1x128xf32>
    %11 = vector.broadcast %10 : vector<1x128xf32> to vector<128x128xf32>
    %12 = arith.addf %9, %11 : vector<128x128xf32>
    %c0_6 = arith.constant 0 : index
    %c0_7 = arith.constant 0 : index
    %c0_8 = arith.constant 0 : index
    %c0_9 = arith.constant 0 : index
    %13 = vector.load %arg8[%c0_6, %c0_7, %c0_8, %c0_9] : memref<1x1x128x128xf32, #tpu.memory_space<vmem>>, vector<1x1x128x128xf32>
    %14 = vector.shape_cast %13 : vector<1x1x128x128xf32> to vector<128x128xf32>
    %15 = vector.shape_cast %12 : vector<128x128xf32> to vector<1x1x128x128xf32>
    tpu.vector_store %arg8[%c0_6, %c0_7, %c0_8, %c0_9], %15 {strides = array<i32>} : memref<1x1x128x128xf32, #tpu.memory_space<vmem>>, vector<1x1x128x128xf32>,
    return
  }
  func.func @transform_0(%arg0: i32, %arg1: i32, %arg2: i32, %arg3: i32) -> (i32, i32, i32) {
    %c0_i32 = arith.constant 0 : i32
    %c0_i32_0 = arith.constant 0 : i32
    %c0_i32_1 = arith.constant 0 : i32
    return %arg0, %c0_i32, %c0_i32_0 : i32, i32, i32
  }
  func.func @transform_1(%arg0: i32, %arg1: i32, %arg2: i32, %arg3: i32) -> (i32, i32, i32) {
    %c0_i32 = arith.constant 0 : i32
    %c0_i32_0 = arith.constant 0 : i32
    %c0_i32_1 = arith.constant 0 : i32
    return %arg0, %c0_i32, %c0_i32_0 : i32, i32, i32
  }
  func.func @transform_2(%arg0: i32, %arg1: i32, %arg2: i32, %arg3: i32) -> (i32, i32, i32) {
    %c0_i32 = arith.constant 0 : i32
    %c0_i32_0 = arith.constant 0 : i32
    %c0_i32_1 = arith.constant 0 : i32
    return %arg1, %c0_i32, %c0_i32_0 : i32, i32, i32
  }
  func.func @transform_3(%arg0: i32, %arg1: i32, %arg2: i32, %arg3: i32) -> (i32, i32, i32) {
    %c0_i32 = arith.constant 0 : i32
    %c0_i32_0 = arith.constant 0 : i32
    %c0_i32_1 = arith.constant 0 : i32
    return %arg1, %c0_i32, %c0_i32_0 : i32, i32, i32
  }
  func.func @transform_4(%arg0: i32, %arg1: i32, %arg2: i32, %arg3: i32) -> (i32, i32, i32, i32) {
    %c0_i32 = arith.constant 0 : i32
    return %arg0, %arg1, %arg3, %arg2 : i32, i32, i32, i32
  }
}

</mosaic_0001>

<llo_original>
// kernel: tpu_custom_call.1
$region0: #{tpu_custom_call.1}
  #allocation0 [shape = 'u32[]', space=smem, size = 0x4, offset = 0x4, fixed_abs, tag = 'smem constant byte address 0x4 - core index']
  #allocation1 [shape = 'u32[144,128]{1,0:T(1,128)}', space=vmem, size = 0x12000, scoped, tag = 'internal scratch']
  #allocation2 [shape = 'f32[64,128]{1,0:T(8,128)}', space=vmem, size = 0x8000, scoped, tag = 'scratch operand']
  #allocation3 [shape = 'f32[1,128]{1,0:T(1,128)}', space=vmem, size = 0x200, scoped, tag = 'scratch operand']
  %s0 = inlined_call_operand.vmem [shape: f32[2,128,64], index: 0, kind: input, shape index: {}]
  %s1 = inlined_call_operand.vmem [shape: f32[2,128,64], index: 1, kind: input, shape index: {}]
  %s2 = inlined_call_operand.vmem [shape: f32[4,65,64], index: 2, kind: input, shape index: {}]
  %s3 = inlined_call_operand.vmem [shape: f32[4,65,1], index: 3, kind: input, shape index: {}]
  %s4 = inlined_call_operand.hbm [shape: f32[2,4,128,128], index: 4, kind: output, shape index: {}]
  %s5 = sld [smem:[#allocation0]]
  $region53: #{tpu_custom_call.1} parent=0
    _
  %s7 = ssub.s32 1, %s5
  %s8 = scalar_select 0, %s7, %s5
  $region1: #{tpu_custom_call.1} parent=0
    #allocation4 [shape = 'u8[131072]{0}', space=vmem, size = 0x20000, scoped, tag = 'output window, operand 0']
    #allocation5 [shape = 's32[2]{0}', space=sflag, size = 0x8, scoped, tag = 'scoped memory for tpu_custom_call.1']
    %9 = vsyncpa [#allocation5], 0
    %s10 = scalar_lea.sflag [#allocation5], 1
    %11 = vsyncpa %s10, 0
    loop: start=0, step=1, limit=10
    $region2: #{tpu_custom_call.1} parent=1 // loop_pre_header
      _
    $region3: #{tpu_custom_call.1} parent=1 // loop_header
      %s13 = sphi 0, %s17
      %p14 = scmp.ge.s32.totalorder %s13, 10
      %s20 = sphi 0, %s46
      %s21 = sphi 0, %s42
      %s22 = sphi 0, %s38
      %s23 = sphi 0, %s34
      %s24 = sphi 0, %s20
      %s25 = sphi 0, %s21
      %s26 = sphi 0, %s22
      %s27 = sphi 0, %s23
      %s28 = sphi 0, %s24
      %s29 = sphi 0, %s25
      %s30 = sphi 0, %s26
      %s31 = sphi 0, %s27
      %s49 = sphi 0, %s51
      %s52 = sphi 0, %s49
      %s53 = sphi 0, %s52
      %s69 = sphi 0, %s53
      %s75 = sphi 0, %s77
      %s78 = sphi 0, %s75
      %s79 = sphi 0, %s78
      %s95 = sphi 0, %s79
      %s101 = sphi 0, %s103
      %s104 = sphi 0, %s101
      %s105 = sphi 0, %s104
      %s121 = sphi 0, %s105
      %s127 = sphi 0, %s129
      %s130 = sphi 0, %s127
      %s131 = sphi 0, %s130
      %s147 = sphi 0, %s131
      %s159 = sphi 0, %s161
      %s162 = sphi 0, %s159
      %s163 = sphi 0, %s162
      %s179 = sphi 0, %s163
    $region4: #{tpu_custom_call.1} parent=1 // loop_header_branch
      %16 = sbr.rel (%p14) target = $region8
    $region5: #{tpu_custom_call.1} parent=1 // loop_body
      %s18 = ssub.s32 %s13, 1
      %s19 = ssub.s32 %s13, 2
      %s32 = sadd.s32 1, %s23
      %p33 = scmp.ge.s32.totalorder %s32, 1
      %s34 = scalar_select %p33, 0, %s32
      %s35 = sadd.s32 1, %s22
      %s36 = scalar_select %p33, %s35, %s22
      %p37 = scmp.ge.s32.totalorder %s36, 1
      %s38 = scalar_select %p37, 0, %s36
      %s39 = sadd.s32 1, %s21
      %s40 = scalar_select %p37, %s39, %s21
      %p41 = scmp.ge.s32.totalorder %s40, 4
      %s42 = scalar_select %p41, 0, %s40
      %s43 = sadd.s32 1, %s20
      %s44 = scalar_select %p41, %s43, %s20
      %p45 = scmp.ge.s32.totalorder %s44, 2
      %s46 = scalar_select %p45, 0, %s44
      %s47 = ssub.s32 %s20, %s46
      %p48 = scmp.eq.s32.totalorder %s47, 0
      %s50 = sadd.s32 %s49, 1
      %s51 = scalar_select %p48, %s49, %s50
      %p54 = pneg %p48
      %p55 = scmp.eq.s32.totalorder %s13, 7
      %p56 = por %p54, %p55
      %p57 = scmp.ne.s32.totalorder %s49, %s52
      %p58 = scmp.eq.s32.totalorder %s13, 0
      %p59 = por %p57, %p58
      %p60 = scmp.ne.s32.totalorder %s49, %s52
      %p61 = scmp.eq.s32.totalorder %s18, 7
      %p62 = por %p60, %p61
      %p63 = scmp.ne.s32.totalorder %s52, %s53
      %p64 = scmp.eq.s32.totalorder %s18, 0
      %p65 = por %p63, %p64
      %p66 = scmp.ne.s32.totalorder %s52, %s53
      %p67 = scmp.eq.s32.totalorder %s19, 7
      %p68 = por %p66, %p67
      %p70 = scmp.ne.s32.totalorder %s53, %s69
      %p71 = scmp.eq.s32.totalorder %s19, 0
      %p72 = por %p70, %p71
      %s73 = ssub.s32 %s20, %s46
      %p74 = scmp.eq.s32.totalorder %s73, 0
      %s76 = sadd.s32 %s75, 1
      %s77 = scalar_select %p74, %s75, %s76
      %p80 = pneg %p74
      %p81 = scmp.eq.s32.totalorder %s13, 7
      %p82 = por %p80, %p81
      %p83 = scmp.ne.s32.totalorder %s75, %s78
      %p84 = scmp.eq.s32.totalorder %s13, 0
      %p85 = por %p83, %p84
      %p86 = scmp.ne.s32.totalorder %s75, %s78
      %p87 = scmp.eq.s32.totalorder %s18, 7
      %p88 = por %p86, %p87
      %p89 = scmp.ne.s32.totalorder %s78, %s79
      %p90 = scmp.eq.s32.totalorder %s18, 0
      %p91 = por %p89, %p90
      %p92 = scmp.ne.s32.totalorder %s78, %s79
      %p93 = scmp.eq.s32.totalorder %s19, 7
      %p94 = por %p92, %p93
      %p96 = scmp.ne.s32.totalorder %s79, %s95
      %p97 = scmp.eq.s32.totalorder %s19, 0
      %p98 = por %p96, %p97
      %s99 = ssub.s32 %s21, %s42
      %p100 = scmp.eq.s32.totalorder %s99, 0
      %s102 = sadd.s32 %s101, 1
      %s103 = scalar_select %p100, %s101, %s102
      %p106 = pneg %p100
      %p107 = scmp.eq.s32.totalorder %s13, 7
      %p108 = por %p106, %p107
      %p109 = scmp.ne.s32.totalorder %s101, %s104
      %p110 = scmp.eq.s32.totalorder %s13, 0
      %p111 = por %p109, %p110
      %p112 = scmp.ne.s32.totalorder %s101, %s104
      %p113 = scmp.eq.s32.totalorder %s18, 7
      %p114 = por %p112, %p113
      %p115 = scmp.ne.s32.totalorder %s104, %s105
      %p116 = scmp.eq.s32.totalorder %s18, 0
      %p117 = por %p115, %p116
      %p118 = scmp.ne.s32.totalorder %s104, %s105
      %p119 = scmp.eq.s32.totalorder %s19, 7
      %p120 = por %p118, %p119
      %p122 = scmp.ne.s32.totalorder %s105, %s121
      %p123 = scmp.eq.s32.totalorder %s19, 0
      %p124 = por %p122, %p123
      %s125 = ssub.s32 %s21, %s42
      %p126 = scmp.eq.s32.totalorder %s125, 0
      %s128 = sadd.s32 %s127, 1
      %s129 = scalar_select %p126, %s127, %s128
      %p132 = pneg %p126
      %p133 = scmp.eq.s32.totalorder %s13, 7
      %p134 = por %p132, %p133
      %p135 = scmp.ne.s32.totalorder %s127, %s130
      %p136 = scmp.eq.s32.totalorder %s13, 0
      %p137 = por %p135, %p136
      %p138 = scmp.ne.s32.totalorder %s127, %s130
      %p139 = scmp.eq.s32.totalorder %s18, 7
      %p140 = por %p138, %p139
      %p141 = scmp.ne.s32.totalorder %s130, %s131
      %p142 = scmp.eq.s32.totalorder %s18, 0
      %p143 = por %p141, %p142
      %p144 = scmp.ne.s32.totalorder %s130, %s131
      %p145 = scmp.eq.s32.totalorder %s19, 7
      %p146 = por %p144, %p145
      %p148 = scmp.ne.s32.totalorder %s131, %s147
      %p149 = scmp.eq.s32.totalorder %s19, 0
      %p150 = por %p148, %p149
      %s151 = ssub.s32 %s20, %s46
      %s152 = ssub.s32 %s21, %s42
      %s153 = sor.u32 %s151, %s152
      %s154 = ssub.s32 %s23, %s34
      %s155 = sor.u32 %s153, %s154
      %s156 = ssub.s32 %s22, %s38
      %s157 = sor.u32 %s155, %s156
      %p158 = scmp.eq.s32.totalorder %s157, 0
      %s160 = sadd.s32 %s159, 1
      %s161 = scalar_select %p158, %s159, %s160
      %p164 = pneg %p158
      %p165 = scmp.eq.s32.totalorder %s13, 7
      %p166 = por %p164, %p165
      %p167 = scmp.ne.s32.totalorder %s159, %s162
      %p168 = scmp.eq.s32.totalorder %s13, 0
      %p169 = por %p167, %p168
      %p170 = scmp.ne.s32.totalorder %s159, %s162
      %p171 = scmp.eq.s32.totalorder %s18, 7
      %p172 = por %p170, %p171
      %p173 = scmp.ne.s32.totalorder %s162, %s163
      %p174 = scmp.eq.s32.totalorder %s18, 0
      %p175 = por %p173, %p174
      %p176 = scmp.ne.s32.totalorder %s162, %s163
      %p177 = scmp.eq.s32.totalorder %s19, 7
      %p178 = por %p176, %p177
      %p180 = scmp.ne.s32.totalorder %s163, %s179
      %p181 = scmp.eq.s32.totalorder %s19, 0
      %p182 = por %p180, %p181
      %p183 = scmp.le.s32.totalorder 1, %s13
      %p184 = scmp.lt.s32.totalorder %s13, 9
      %p185 = pnand %p183, %p184
      %p186 = pneg %p185
      // Predicated region
      $region9: #{tpu_custom_call.1} parent=5 // pred_check
        _
      $region10: #{tpu_custom_call.1} parent=5 // pred_check_branch
        %188 = sbr.rel (%p185) target = $region12
      $region11: #{tpu_custom_call.1} parent=5 // pred_region
        %s189 = ssub.s32 %s13, 1
      $region12: #{tpu_custom_call.1} parent=5 // pred_fallthru
        _
      %p190 = scmp.lt.s32.totalorder %s13, 8
      // Predicated region
      $region13: #{tpu_custom_call.1} parent=5 // pred_check
        %p191 = pneg %p190
      $region14: #{tpu_custom_call.1} parent=5 // pred_check_branch
        %193 = sbr.rel (%p191) target = $region16
      $region15: #{tpu_custom_call.1} parent=5 // pred_region
        // Predicated region
        $region17: #{tpu_custom_call.1} parent=15 // pred_check
          %p194 = pneg %p59
        $region18: #{tpu_custom_call.1} parent=15 // pred_check_branch
          %196 = sbr.rel (%p194) target = $region20
        $region19: #{tpu_custom_call.1} parent=15 // pred_region
          %p197 = scmp.lt.s32.totalorder %s20, 1
          %s198 = scalar_select %p197, %s20, 1
          %s199 = smul.addr %s198, 16
          %s200 = smul.addr %s199, 8
          %s201 = scalar_lea.vmem %s0, %s200
        $region20: #{tpu_custom_call.1} parent=15 // pred_fallthru
          _
        // Predicated region
        $region21: #{tpu_custom_call.1} parent=15 // pred_check
          %p202 = pneg %p85
        $region22: #{tpu_custom_call.1} parent=15 // pred_check_branch
          %204 = sbr.rel (%p202) target = $region24
        $region23: #{tpu_custom_call.1} parent=15 // pred_region
          %p205 = scmp.lt.s32.totalorder %s20, 1
          %s206 = scalar_select %p205, %s20, 1
          %s207 = smul.addr %s206, 16
          %s208 = smul.addr %s207, 8
          %s209 = scalar_lea.vmem %s1, %s208
        $region24: #{tpu_custom_call.1} parent=15 // pred_fallthru
          _
        // Predicated region
        $region25: #{tpu_custom_call.1} parent=15 // pred_check
          %p210 = pneg %p111
        $region26: #{tpu_custom_call.1} parent=15 // pred_check_branch
          %212 = sbr.rel (%p210) target = $region28
        $region27: #{tpu_custom_call.1} parent=15 // pred_region
          %p213 = scmp.lt.s32.totalorder %s21, 3
          %s214 = scalar_select %p213, %s21, 3
          %s215 = smul.addr %s214, 9
          %s216 = smul.addr %s215, 8
          %s217 = scalar_lea.vmem %s2, %s216
        $region28: #{tpu_custom_call.1} parent=15 // pred_fallthru
          _
        // Predicated region
        $region29: #{tpu_custom_call.1} parent=15 // pred_check
          %p218 = pneg %p137
        $region30: #{tpu_custom_call.1} parent=15 // pred_check_branch
          %220 = sbr.rel (%p218) target = $region32
        $region31: #{tpu_custom_call.1} parent=15 // pred_region
          %p221 = scmp.lt.s32.totalorder %s21, 3
          %s222 = scalar_select %p221, %s21, 3
          %s223 = smul.addr %s222, 9
          %s224 = smul.addr %s223, 8
          %s225 = scalar_lea.vmem %s3, %s224
        $region32: #{tpu_custom_call.1} parent=15 // pred_fallthru
          _
      $region16: #{tpu_custom_call.1} parent=5 // pred_fallthru
        _
      %p226 = scmp.le.s32.totalorder 1, %s13
      %p227 = scmp.lt.s32.totalorder %s13, 9
      %p228 = pnand %p226, %p227
      %p229 = pneg %p228
      // Predicated region
      $region33: #{tpu_custom_call.1} parent=5 // pred_check
        _
      $region34: #{tpu_custom_call.1} parent=5 // pred_check_branch
        %231 = sbr.rel (%p228) target = $region36
      $region35: #{tpu_custom_call.1} parent=5 // pred_region
        %s232 = ssub.s32 %s13, 1
        %p233 = scmp.lt.s32.totalorder %s24, 1
        %s234 = scalar_select %p233, %s24, 1
        %s235 = smul.addr %s234, 16
        %s236 = smul.addr %s235, 8
        %s237 = scalar_lea.vmem %s0, %s236
        %p238 = pneg %p65
        %p239 = pneg %p62
        %p240 = scmp.lt.s32.totalorder %s24, 1
        %s241 = scalar_select %p240, %s24, 1
        %s242 = smul.addr %s241, 16
        %s243 = smul.addr %s242, 8
        %s244 = scalar_lea.vmem %s1, %s243
        %p245 = pneg %p91
        %p246 = pneg %p88
        %p247 = scmp.lt.s32.totalorder %s25, 3
        %s248 = scalar_select %p247, %s25, 3
        %s249 = smul.addr %s248, 9
        %s250 = smul.addr %s249, 8
        %s251 = scalar_lea.vmem %s2, %s250
        %p252 = pneg %p117
        %p253 = pneg %p114
        %p254 = scmp.lt.s32.totalorder %s25, 3
        %s255 = scalar_select %p254, %s25, 3
        %s256 = smul.addr %s255, 9
        %s257 = smul.addr %s256, 8
        %s258 = scalar_lea.vmem %s3, %s257
        %p259 = pneg %p143
        %p260 = pneg %p140
        %p261 = pneg %p175
        %p262 = pneg %p172
        %s263 = sand.u32 %s162, 1
        %s264 = scalar_lea.sflag [#allocation5], %s263
        %s265 = sand.u32 %s162, 1
        %s266 = smul.addr %s265, 128
        %s267 = scalar_lea.vmem [#allocation4], %s266
        %p268 = scmp.lt.s32.totalorder %s24, 1
        %s269 = scalar_select %p268, %s24, 1
        %s270 = smul.addr %s269, 16
        %s271 = smul.addr %s270, 8
        %s272 = scalar_lea.vmem %s0, %s271
        %p273 = scmp.lt.s32.totalorder %s24, 1
        %s274 = scalar_select %p273, %s24, 1
        %s275 = smul.addr %s274, 16
        %s276 = smul.addr %s275, 8
        %s277 = scalar_lea.vmem %s1, %s276
        %p278 = scmp.lt.s32.totalorder %s25, 3
        %s279 = scalar_select %p278, %s25, 3
        %s280 = smul.addr %s279, 9
        %s281 = smul.addr %s280, 8
        %s282 = scalar_lea.vmem %s2, %s281
        %p283 = scmp.lt.s32.totalorder %s25, 3
        %s284 = scalar_select %p283, %s25, 3
        %s285 = smul.addr %s284, 9
        %s286 = smul.addr %s285, 8
        %s287 = scalar_lea.vmem %s3, %s286
        %s288 = smul.u32 16, %s27
        %p289 = scmp.eq.s32.totalorder %s27, 0
        // Predicated region
        $region37: #{tpu_custom_call.1} parent=35 // pred_check
          %p290 = pneg %p289
        $region38: #{tpu_custom_call.1} parent=35 // pred_check_branch
          %292 = sbr.rel (%p290) target = $region40
        $region39: #{tpu_custom_call.1} parent=35 // pred_region
          %s293 = smul.u32 %s26, 128
          %s294 = scalar_lea.vmem %s272, %s293
          %v295 = vld [vmem:[%s294] sm:$0xff]
          %v296 = vld [vmem:[%s294 + $0x8] sm:$0xff]
          %v297 = vld [vmem:[%s294 + $0x10] sm:$0xff]
          %v298 = vld [vmem:[%s294 + $0x18] sm:$0xff]
          %v299 = vld [vmem:[%s294 + $0x20] sm:$0xff]
          %v300 = vld [vmem:[%s294 + $0x28] sm:$0xff]
          %v301 = vld [vmem:[%s294 + $0x30] sm:$0xff]
          %v302 = vld [vmem:[%s294 + $0x38] sm:$0xff]
          %v303 = vld [vmem:[%s294 + $0x40] sm:$0xff]
          %v304 = vld [vmem:[%s294 + $0x48] sm:$0xff]
          %v305 = vld [vmem:[%s294 + $0x50] sm:$0xff]
          %v306 = vld [vmem:[%s294 + $0x58] sm:$0xff]
          %v307 = vld [vmem:[%s294 + $0x60] sm:$0xff]
          %v308 = vld [vmem:[%s294 + $0x68] sm:$0xff]
          %v309 = vld [vmem:[%s294 + $0x70] sm:$0xff]
          %v310 = vld [vmem:[%s294 + $0x78] sm:$0xff]
          %v311 = vld [vmem:[%s282] sm:$0xff]
          %v312 = vld [vmem:[%s282 + $0x8] sm:$0xff]
          %v313 = vld [vmem:[%s282 + $0x10] sm:$0xff]
          %v314 = vld [vmem:[%s282 + $0x18] sm:$0xff]
          %v315 = vld [vmem:[%s282 + $0x20] sm:$0xff]
          %v316 = vld [vmem:[%s282 + $0x28] sm:$0xff]
          %v317 = vld [vmem:[%s282 + $0x30] sm:$0xff]
          %v318 = vld [vmem:[%s282 + $0x38] sm:$0xff]
          %v319 = vld [vmem:[%s282 + $0x40] sm:$0x1]
          %v320 = vld [vmem:[%s287] sm:$0xff]
          %v321 = vld [vmem:[%s287 + $0x8] sm:$0xff]
          %v322 = vld [vmem:[%s287 + $0x10] sm:$0xff]
          %v323 = vld [vmem:[%s287 + $0x18] sm:$0xff]
          %v324 = vld [vmem:[%s287 + $0x20] sm:$0xff]
          %v325 = vld [vmem:[%s287 + $0x28] sm:$0xff]
          %v326 = vld [vmem:[%s287 + $0x30] sm:$0xff]
          %v327 = vld [vmem:[%s287 + $0x38] sm:$0xff]
          %v328 = vld [vmem:[%s287 + $0x40] sm:$0x1]
          %330 = vset.pattern.permute.xlu0 0
          %331 = vperm.xlu0 %330, %v320
          %v332 = vpop.permute.xlu0 %331
          %335 = vset.pattern.permute.xlu0 0
          %336 = vperm.xlu0 %335, %v321
          %v337 = vpop.permute.xlu0 %336
          %340 = vset.pattern.permute.xlu0 0
          %341 = vperm.xlu0 %340, %v322
          %v342 = vpop.permute.xlu0 %341
          %345 = vset.pattern.permute.xlu0 0
          %346 = vperm.xlu0 %345, %v323
          %v347 = vpop.permute.xlu0 %346
          %350 = vset.pattern.permute.xlu0 0
          %351 = vperm.xlu0 %350, %v324
          %v352 = vpop.permute.xlu0 %351
          %355 = vset.pattern.permute.xlu0 0
          %356 = vperm.xlu0 %355, %v325
          %v357 = vpop.permute.xlu0 %356
          %360 = vset.pattern.permute.xlu0 0
          %361 = vperm.xlu0 %360, %v326
          %v362 = vpop.permute.xlu0 %361
          %365 = vset.pattern.permute.xlu0 0
          %366 = vperm.xlu0 %365, %v327
          %v367 = vpop.permute.xlu0 %366
          %370 = vset.pattern.permute.xlu0 0
          %371 = vperm.xlu0 %370, %v328
          %v372 = vpop.permute.xlu0 %371
          %vm374 = vcmask 523264
          %v376 = vsel %vm374, %v311, 0
          %v379 = vsel %vm374, %v312, 0
          %v382 = vsel %vm374, %v313, 0
          %v385 = vsel %vm374, %v314, 0
          %v388 = vsel %vm374, %v315, 0
          %v391 = vsel %vm374, %v316, 0
          %v394 = vsel %vm374, %v317, 0
          %v397 = vsel %vm374, %v318, 0
          %v400 = vsel %vm374, %v319, 0
          %v403 = vsel %vm374, %v295, 0
          %v406 = vsel %vm374, %v296, 0
          %v409 = vsel %vm374, %v297, 0
          %v412 = vsel %vm374, %v298, 0
          %v415 = vsel %vm374, %v299, 0
          %v418 = vsel %vm374, %v300, 0
          %v421 = vsel %vm374, %v301, 0
          %v424 = vsel %vm374, %v302, 0
          %v427 = vsel %vm374, %v303, 0
          %v430 = vsel %vm374, %v304, 0
          %v433 = vsel %vm374, %v305, 0
          %v436 = vsel %vm374, %v306, 0
          %v439 = vsel %vm374, %v307, 0
          %v442 = vsel %vm374, %v308, 0
          %v445 = vsel %vm374, %v309, 0
          %v448 = vsel %vm374, %v310, 0
          %450 = vmatprep.subr.mxu0 0.0
          %451 = vmatpush1.xpose.msra.mxu0 %v403
          %452 = vmatprep.subr.mxu0 0.0
          %453 = vmatpush1.xpose.msra.mxu0 %v406
          %454 = vmatprep.subr.mxu0 0.0
          %455 = vmatpush1.xpose.msra.mxu0 %v409
          %456 = vmatprep.subr.mxu0 0.0
          %457 = vmatpush1.xpose.msra.mxu0 %v412
          %458 = vmatprep.subr.mxu0 0.0
          %459 = vmatpush1.xpose.msra.mxu0 %v415
          %460 = vmatprep.subr.mxu0 0.0
          %461 = vmatpush1.xpose.msra.mxu0 %v418
          %462 = vmatprep.subr.mxu0 0.0
          %463 = vmatpush1.xpose.msra.mxu0 %v421
          %464 = vmatprep.subr.mxu0 0.0
          %465 = vmatpush1.xpose.msra.mxu0 %v424
          %466 = vmatprep.subr.mxu0 0.0
          %467 = vmatpush1.xpose.msra.mxu0 %v427
          %468 = vmatprep.subr.mxu0 0.0
          %469 = vmatpush1.xpose.msra.mxu0 %v430
          %470 = vmatprep.subr.mxu0 0.0
          %471 = vmatpush1.xpose.msra.mxu0 %v433
          %472 = vmatprep.subr.mxu0 0.0
          %473 = vmatpush1.xpose.msra.mxu0 %v436
          %474 = vmatprep.subr.mxu0 0.0
          %475 = vmatpush1.xpose.msra.mxu0 %v439
          %476 = vmatprep.subr.mxu0 0.0
          %477 = vmatpush1.xpose.msra.mxu0 %v442
          %478 = vmatprep.subr.mxu0 0.0
          %479 = vmatpush1.xpose.msra.mxu0 %v445
          %480 = vmatprep.subr.mxu0 0.0
          %481 = vmatpush1.xpose.msra.mxu0 %v448
          %482 = vmatprep.subr.mxu0 0.0
          %483 = vmatpush1.xpose.msra.mxu0 0.0
          %484 = vmatprep.subr.mxu0 0.0
          %485 = vmatpush1.xpose.msra.mxu0 0.0
          %486 = vmatprep.subr.mxu0 0.0
          %487 = vmatpush1.xpose.msra.mxu0 0.0
          %488 = vmatprep.subr.mxu0 0.0
          %489 = vmatpush1.xpose.msra.mxu0 0.0
          %490 = vmatprep.subr.mxu0 0.0
          %491 = vmatpush1.xpose.msra.mxu0 0.0
          %492 = vmatprep.subr.mxu0 0.0
          %493 = vmatpush1.xpose.msra.mxu0 0.0
          %494 = vmatprep.subr.mxu0 0.0
          %495 = vmatpush1.xpose.msra.mxu0 0.0
          %496 = vmatprep.subr.mxu0 0.0
          %497 = vmatpush1.xpose.msra.mxu0 0.0
          %498 = vmatprep.subr.mxu0 0.0
          %499 = vmatpush1.xpose.msra.mxu0 0.0
          %500 = vmatprep.subr.mxu0 0.0
          %501 = vmatpush1.xpose.msra.mxu0 0.0
          %502 = vmatprep.subr.mxu0 0.0
          %503 = vmatpush1.xpose.msra.mxu0 0.0
          %504 = vmatprep.subr.mxu0 0.0
          %505 = vmatpush1.xpose.msra.mxu0 0.0
          %506 = vmatprep.subr.mxu0 0.0
          %507 = vmatpush1.xpose.msra.mxu0 0.0
          %508 = vmatprep.subr.mxu0 0.0
          %509 = vmatpush1.xpose.msra.mxu0 0.0
          %510 = vmatprep.subr.mxu0 0.0
          %511 = vmatpush1.xpose.msra.mxu0 0.0
          %512 = vmatprep.subr.mxu0 0.0
          %513 = vmatpush1.xpose.msra.mxu0 0.0
          %514 = vmatprep.mubr.f32.mxu0 0.0
          %515 = vmatmul.mubr.f32.gmra.mrb[0].mxu0 %v376
          %v516 = vpop.f32.mrb[0].mxu0
          %v517 = vadd.f32 %v332, %v516
          %v518 = vpop.f32.mrb[0].mxu0
          %519 = vmatprep.mubr.f32.mxu0 0.0
          %520 = vmatmul.mubr.f32.gmra.mrb[0].mxu0 %v379
          %v521 = vpop.f32.mrb[0].mxu0
          %v522 = vadd.f32 %v337, %v521
          %v523 = vpop.f32.mrb[0].mxu0
          %524 = vmatprep.mubr.f32.mxu0 0.0
          %525 = vmatmul.mubr.f32.gmra.mrb[0].mxu0 %v382
          %v526 = vpop.f32.mrb[0].mxu0
          %v527 = vadd.f32 %v342, %v526
          %v528 = vpop.f32.mrb[0].mxu0
          %529 = vmatprep.mubr.f32.mxu0 0.0
          %530 = vmatmul.mubr.f32.gmra.mrb[0].mxu0 %v385
          %v531 = vpop.f32.mrb[0].mxu0
          %v532 = vadd.f32 %v347, %v531
          %v533 = vpop.f32.mrb[0].mxu0
          %534 = vmatprep.mubr.f32.mxu0 0.0
          %535 = vmatmul.mubr.f32.gmra.mrb[0].mxu0 %v388
          %v536 = vpop.f32.mrb[0].mxu0
          %v537 = vadd.f32 %v352, %v536
          %v538 = vpop.f32.mrb[0].mxu0
          %539 = vmatprep.mubr.f32.mxu0 0.0
          %540 = vmatmul.mubr.f32.gmra.mrb[0].mxu0 %v391
          %v541 = vpop.f32.mrb[0].mxu0
          %v542 = vadd.f32 %v357, %v541
          %v543 = vpop.f32.mrb[0].mxu0
          %544 = vmatprep.mubr.f32.mxu0 0.0
          %545 = vmatmul.mubr.f32.gmra.mrb[0].mxu0 %v394
          %v546 = vpop.f32.mrb[0].mxu0
          %v547 = vadd.f32 %v362, %v546
          %v548 = vpop.f32.mrb[0].mxu0
          %549 = vmatprep.mubr.f32.mxu0 0.0
          %550 = vmatmul.mubr.f32.gmra.mrb[0].mxu0 %v397
          %v551 = vpop.f32.mrb[0].mxu0
          %v552 = vadd.f32 %v367, %v551
          %v553 = vpop.f32.mrb[0].mxu0
          %554 = vmatprep.mubr.f32.mxu0 0.0
          %555 = vmatmul.mubr.f32.gmra.mrb[0].mxu0 %v400
          %v556 = vpop.f32.mrb[0].mxu0
          %v557 = vadd.f32 %v372, %v556
          %v558 = vpop.f32.mrb[0].mxu0
          %559 = vdwg.mxu0
          %560 = vst [vmem:[#allocation2] sm:$0xff] %v517
          %561 = vst [vmem:[#allocation2 + $0x8] sm:$0xff] %v522
          %562 = vst [vmem:[#allocation2 + $0x10] sm:$0xff] %v527
          %563 = vst [vmem:[#allocation2 + $0x18] sm:$0xff] %v532
          %564 = vst [vmem:[#allocation2 + $0x20] sm:$0xff] %v537
          %565 = vst [vmem:[#allocation2 + $0x28] sm:$0xff] %v542
          %566 = vst [vmem:[#allocation2 + $0x30] sm:$0xff] %v547
          %567 = vst [vmem:[#allocation2 + $0x38] sm:$0xff] %v552
          %568 = vst [vmem:[#allocation3] sm:$0x1] %v557
        $region40: #{tpu_custom_call.1} parent=35 // pred_fallthru
          _
        %s569 = smul.u32 %s27, 128
        %s570 = scalar_lea.vmem %s277, %s569
        %v571 = vld [vmem:[%s570] sm:$0xff]
        %v572 = vld [vmem:[%s570 + $0x8] sm:$0xff]
        %v573 = vld [vmem:[%s570 + $0x10] sm:$0xff]
        %v574 = vld [vmem:[%s570 + $0x18] sm:$0xff]
        %v575 = vld [vmem:[%s570 + $0x20] sm:$0xff]
        %v576 = vld [vmem:[%s570 + $0x28] sm:$0xff]
        %v577 = vld [vmem:[%s570 + $0x30] sm:$0xff]
        %v578 = vld [vmem:[%s570 + $0x38] sm:$0xff]
        %v579 = vld [vmem:[%s570 + $0x40] sm:$0xff]
        %v580 = vld [vmem:[%s570 + $0x48] sm:$0xff]
        %v581 = vld [vmem:[%s570 + $0x50] sm:$0xff]
        %v582 = vld [vmem:[%s570 + $0x58] sm:$0xff]
        %v583 = vld [vmem:[%s570 + $0x60] sm:$0xff]
        %v584 = vld [vmem:[%s570 + $0x68] sm:$0xff]
        %v585 = vld [vmem:[%s570 + $0x70] sm:$0xff]
        %v586 = vld [vmem:[%s570 + $0x78] sm:$0xff]
        %v587 = vld [vmem:[#allocation2] sm:$0xff]
        %v588 = vld [vmem:[#allocation2 + $0x8] sm:$0xff]
        %v589 = vld [vmem:[#allocation2 + $0x10] sm:$0xff]
        %v590 = vld [vmem:[#allocation2 + $0x18] sm:$0xff]
        %v591 = vld [vmem:[#allocation2 + $0x20] sm:$0xff]
        %v592 = vld [vmem:[#allocation2 + $0x28] sm:$0xff]
        %v593 = vld [vmem:[#allocation2 + $0x30] sm:$0xff]
        %v594 = vld [vmem:[#allocation2 + $0x38] sm:$0xff]
        %v595 = vld [vmem:[#allocation3] sm:$0x1]
        %v597 = vlaneseq
        %v598 = vshrl.u32 %v597, 7
        %v599 = vsub.s32 0, %v598
        %v600 = vrot.slane %v595, %v599
        %vm602 = vcmask 523264
        %v604 = vsel %vm602, %v571, 0
        %v607 = vsel %vm602, %v572, 0
        %v610 = vsel %vm602, %v573, 0
        %v613 = vsel %vm602, %v574, 0
        %v616 = vsel %vm602, %v575, 0
        %v619 = vsel %vm602, %v576, 0
        %v622 = vsel %vm602, %v577, 0
        %v625 = vsel %vm602, %v578, 0
        %v628 = vsel %vm602, %v579, 0
        %v631 = vsel %vm602, %v580, 0
        %v634 = vsel %vm602, %v581, 0
        %v637 = vsel %vm602, %v582, 0
        %v640 = vsel %vm602, %v583, 0
        %v643 = vsel %vm602, %v584, 0
        %v646 = vsel %vm602, %v585, 0
        %v649 = vsel %vm602, %v586, 0
        %651 = vmatprep.subr.mxu0 0.0
        %652 = vmatpush1.msra.mxu0 %v587
        %653 = vmatprep.subr.mxu0 0.0
        %654 = vmatpush1.msra.mxu0 %v588
        %655 = vmatprep.subr.mxu0 0.0
        %656 = vmatpush1.msra.mxu0 %v589
        %657 = vmatprep.subr.mxu0 0.0
        %658 = vmatpush1.msra.mxu0 %v590
        %659 = vmatprep.subr.mxu0 0.0
        %660 = vmatpush1.msra.mxu0 %v591
        %661 = vmatprep.subr.mxu0 0.0
        %662 = vmatpush1.msra.mxu0 %v592
        %663 = vmatprep.subr.mxu0 0.0
        %664 = vmatpush1.msra.mxu0 %v593
        %665 = vmatprep.subr.mxu0 0.0
        %666 = vmatpush1.msra.mxu0 %v594
        %667 = vmatprep.subr.mxu0 0.0
        %668 = vmatpush1.msra.mxu0 0.0
        %669 = vmatprep.subr.mxu0 0.0
        %670 = vmatpush1.msra.mxu0 0.0
        %671 = vmatprep.subr.mxu0 0.0
        %672 = vmatpush1.msra.mxu0 0.0
        %673 = vmatprep.subr.mxu0 0.0
        %674 = vmatpush1.msra.mxu0 0.0
        %675 = vmatprep.subr.mxu0 0.0
        %676 = vmatpush1.msra.mxu0 0.0
        %677 = vmatprep.subr.mxu0 0.0
        %678 = vmatpush1.msra.mxu0 0.0
        %679 = vmatprep.subr.mxu0 0.0
        %680 = vmatpush1.msra.mxu0 0.0
        %681 = vmatprep.subr.mxu0 0.0
        %682 = vmatpush1.msra.mxu0 0.0
        %683 = vmatprep.subr.mxu0 0.0
        %684 = vmatpush1.msra.mxu0 0.0
        %685 = vmatprep.subr.mxu0 0.0
        %686 = vmatpush1.msra.mxu0 0.0
        %687 = vmatprep.subr.mxu0 0.0
        %688 = vmatpush1.msra.mxu0 0.0
        %689 = vmatprep.subr.mxu0 0.0
        %690 = vmatpush1.msra.mxu0 0.0
        %691 = vmatprep.subr.mxu0 0.0
        %692 = vmatpush1.msra.mxu0 0.0
        %693 = vmatprep.subr.mxu0 0.0
        %694 = vmatpush1.msra.mxu0 0.0
        %695 = vmatprep.subr.mxu0 0.0
        %696 = vmatpush1.msra.mxu0 0.0
        %697 = vmatprep.subr.mxu0 0.0
        %698 = vmatpush1.msra.mxu0 0.0
        %699 = vmatprep.subr.mxu0 0.0
        %700 = vmatpush1.msra.mxu0 0.0
        %701 = vmatprep.subr.mxu0 0.0
        %702 = vmatpush1.msra.mxu0 0.0
        %703 = vmatprep.subr.mxu0 0.0
        %704 = vmatpush1.msra.mxu0 0.0
        %705 = vmatprep.subr.mxu0 0.0
        %706 = vmatpush1.msra.mxu0 0.0
        %707 = vmatprep.subr.mxu0 0.0
        %708 = vmatpush1.msra.mxu0 0.0
        %709 = vmatprep.subr.mxu0 0.0
        %710 = vmatpush1.msra.mxu0 0.0
        %711 = vmatprep.subr.mxu0 0.0
        %712 = vmatpush1.msra.mxu0 0.0
        %713 = vmatprep.subr.mxu0 0.0
        %714 = vmatpush1.msra.mxu0 0.0
        %715 = vmatprep.mubr.f32.mxu0 0.0
        %716 = vmatmul.mubr.f32.gmra.mrb[0].mxu0 %v604
        %v717 = vpop.f32.mrb[0].mxu0
        %v718 = vadd.f32 %v600, %v717
        %v719 = vpop.f32.mrb[0].mxu0
        %720 = vmatprep.mubr.f32.mxu0 0.0
        %721 = vmatmul.mubr.f32.gmra.mrb[0].mxu0 %v607
        %v722 = vpop.f32.mrb[0].mxu0
        %v723 = vadd.f32 %v600, %v722
        %v724 = vpop.f32.mrb[0].mxu0
        %725 = vmatprep.mubr.f32.mxu0 0.0
        %726 = vmatmul.mubr.f32.gmra.mrb[0].mxu0 %v610
        %v727 = vpop.f32.mrb[0].mxu0
        %v728 = vadd.f32 %v600, %v727
        %v729 = vpop.f32.mrb[0].mxu0
        %730 = vmatprep.mubr.f32.mxu0 0.0
        %731 = vmatmul.mubr.f32.gmra.mrb[0].mxu0 %v613
        %v732 = vpop.f32.mrb[0].mxu0
        %v733 = vadd.f32 %v600, %v732
        %v734 = vpop.f32.mrb[0].mxu0
        %735 = vmatprep.mubr.f32.mxu0 0.0
        %736 = vmatmul.mubr.f32.gmra.mrb[0].mxu0 %v616
        %v737 = vpop.f32.mrb[0].mxu0
        %v738 = vadd.f32 %v600, %v737
        %v739 = vpop.f32.mrb[0].mxu0
        %740 = vmatprep.mubr.f32.mxu0 0.0
        %741 = vmatmul.mubr.f32.gmra.mrb[0].mxu0 %v619
        %v742 = vpop.f32.mrb[0].mxu0
        %v743 = vadd.f32 %v600, %v742
        %v744 = vpop.f32.mrb[0].mxu0
        %745 = vmatprep.mubr.f32.mxu0 0.0
        %746 = vmatmul.mubr.f32.gmra.mrb[0].mxu0 %v622
        %v747 = vpop.f32.mrb[0].mxu0
        %v748 = vadd.f32 %v600, %v747
        %v749 = vpop.f32.mrb[0].mxu0
        %750 = vmatprep.mubr.f32.mxu0 0.0
        %751 = vmatmul.mubr.f32.gmra.mrb[0].mxu0 %v625
        %v752 = vpop.f32.mrb[0].mxu0
        %v753 = vadd.f32 %v600, %v752
        %v754 = vpop.f32.mrb[0].mxu0
        %755 = vmatprep.mubr.f32.mxu0 0.0
        %756 = vmatmul.mubr.f32.gmra.mrb[0].mxu0 %v628
        %v757 = vpop.f32.mrb[0].mxu0
        %v758 = vadd.f32 %v600, %v757
        %v759 = vpop.f32.mrb[0].mxu0
        %760 = vmatprep.mubr.f32.mxu0 0.0
        %761 = vmatmul.mubr.f32.gmra.mrb[0].mxu0 %v631
        %v762 = vpop.f32.mrb[0].mxu0
        %v763 = vadd.f32 %v600, %v762
        %v764 = vpop.f32.mrb[0].mxu0
        %765 = vmatprep.mubr.f32.mxu0 0.0
        %766 = vmatmul.mubr.f32.gmra.mrb[0].mxu0 %v634
        %v767 = vpop.f32.mrb[0].mxu0
        %v768 = vadd.f32 %v600, %v767
        %v769 = vpop.f32.mrb[0].mxu0
        %770 = vmatprep.mubr.f32.mxu0 0.0
        %771 = vmatmul.mubr.f32.gmra.mrb[0].mxu0 %v637
        %v772 = vpop.f32.mrb[0].mxu0
        %v773 = vadd.f32 %v600, %v772
        %v774 = vpop.f32.mrb[0].mxu0
        %775 = vmatprep.mubr.f32.mxu0 0.0
        %776 = vmatmul.mubr.f32.gmra.mrb[0].mxu0 %v640
        %v777 = vpop.f32.mrb[0].mxu0
        %v778 = vadd.f32 %v600, %v777
        %v779 = vpop.f32.mrb[0].mxu0
        %780 = vmatprep.mubr.f32.mxu0 0.0
        %781 = vmatmul.mubr.f32.gmra.mrb[0].mxu0 %v643
        %v782 = vpop.f32.mrb[0].mxu0
        %v783 = vadd.f32 %v600, %v782
        %v784 = vpop.f32.mrb[0].mxu0
        %785 = vmatprep.mubr.f32.mxu0 0.0
        %786 = vmatmul.mubr.f32.gmra.mrb[0].mxu0 %v646
        %v787 = vpop.f32.mrb[0].mxu0
        %v788 = vadd.f32 %v600, %v787
        %v789 = vpop.f32.mrb[0].mxu0
        %790 = vmatprep.mubr.f32.mxu0 0.0
        %791 = vmatmul.mubr.f32.gmra.mrb[0].mxu0 %v649
        %v792 = vpop.f32.mrb[0].mxu0
        %v793 = vadd.f32 %v600, %v792
        %v794 = vpop.f32.mrb[0].mxu0
        %795 = vdwg.mxu0
        %796 = vst [vmem:[%s267] sm:$0xff] %v718
        %797 = vst [vmem:[%s267 + $0x8] sm:$0xff] %v723
        %798 = vst [vmem:[%s267 + $0x10] sm:$0xff] %v728
        %799 = vst [vmem:[%s267 + $0x18] sm:$0xff] %v733
        %800 = vst [vmem:[%s267 + $0x20] sm:$0xff] %v738
        %801 = vst [vmem:[%s267 + $0x28] sm:$0xff] %v743
        %802 = vst [vmem:[%s267 + $0x30] sm:$0xff] %v748
        %803 = vst [vmem:[%s267 + $0x38] sm:$0xff] %v753
        %804 = vst [vmem:[%s267 + $0x40] sm:$0xff] %v758
        %805 = vst [vmem:[%s267 + $0x48] sm:$0xff] %v763
        %806 = vst [vmem:[%s267 + $0x50] sm:$0xff] %v768
        %807 = vst [vmem:[%s267 + $0x58] sm:$0xff] %v773
        %808 = vst [vmem:[%s267 + $0x60] sm:$0xff] %v778
        %809 = vst [vmem:[%s267 + $0x68] sm:$0xff] %v783
        %810 = vst [vmem:[%s267 + $0x70] sm:$0xff] %v788
        %811 = vst [vmem:[%s267 + $0x78] sm:$0xff] %v793
        %s812 = sand.u32 %s162, 1
        %s813 = scalar_lea.sflag [#allocation5], %s812
        %s814 = sand.u32 %s162, 1
        %s815 = smul.addr %s814, 128
        %s816 = scalar_lea.vmem [#allocation4], %s815
        // Predicated region
        $region41: #{tpu_custom_call.1} parent=35 // pred_check
          %p817 = pneg %p172
        $region42: #{tpu_custom_call.1} parent=35 // pred_check_branch
          %819 = sbr.rel (%p817) target = $region44
        $region43: #{tpu_custom_call.1} parent=35 // pred_region
          %s820 = smul.u32 16, %s27
          %s822 = ssub.s32 2048, 2048
          %823 = vsyncadd %s813, %s822
          %s824 = sadd.s32 %s26, %s820
          %s825 = smul.addr %s25, 16
          %s826 = sadd.s32 %s824, %s825
          %s827 = smul.addr %s24, 64
          %s828 = sadd.s32 %s826, %s827
          %s829 = smul.addr %s828, 128
          %s830 = scalar_lea.hbm %s4, %s829
          %s831 = sshll.u32 %s816, 4
          %s832 = int_to_ptr.vmem [resolvable:$true] %s831
          %837 = dma.vmem_to_hbm [thread:$0]  %s832, 2048, %s830, %s813, 128, 128, 8
        $region44: #{tpu_custom_call.1} parent=35 // pred_fallthru
          _
      $region36: #{tpu_custom_call.1} parent=5 // pred_fallthru
        _
      %p838 = scmp.le.s32.totalorder 2, %s13
      // Predicated region
      $region45: #{tpu_custom_call.1} parent=5 // pred_check
        %p839 = pneg %p838
      $region46: #{tpu_custom_call.1} parent=5 // pred_check_branch
        %841 = sbr.rel (%p839) target = $region48
      $region47: #{tpu_custom_call.1} parent=5 // pred_region
        %s842 = ssub.s32 %s13, 2
        // Predicated region
        $region49: #{tpu_custom_call.1} parent=47 // pred_check
          %p843 = pneg %p178
        $region50: #{tpu_custom_call.1} parent=47 // pred_check_branch
          %845 = sbr.rel (%p843) target = $region52
        $region51: #{tpu_custom_call.1} parent=47 // pred_region
          %s846 = sand.u32 %s163, 1
          %s847 = scalar_lea.sflag [#allocation5], %s846
          %s848 = sand.u32 %s163, 1
          %s849 = smul.addr %s848, 128
          %s850 = scalar_lea.vmem [#allocation4], %s849
          %851 = dma.done %s847, 2048
        $region52: #{tpu_custom_call.1} parent=47 // pred_fallthru
          _
      $region48: #{tpu_custom_call.1} parent=5 // pred_fallthru
        _
    $region6: #{tpu_custom_call.1} parent=1 // loop_footer
      %s17 = sadd.s32 1, %s13
    $region7: #{tpu_custom_call.1} parent=1 // loop_footer_branch
      %12 = sbr.rel target = $region3
    $region8: #{tpu_custom_call.1} parent=1 // loop_exit
      _
    %852 = vsyncpa [#allocation5], 1
    %s853 = scalar_lea.sflag [#allocation5], 1
    %854 = vsyncpa %s853, 1

</llo_original>
